<compile_context>
chip_gen: v7x
topology: tpu7x:2x2x1
jax: 0.10.0
libtpu: 0.0.40
codegen_flags: <defaults>
</compile_context>

<pallas_src>
import functools

import jax
import jax.numpy as jnp
from jax.experimental import pallas as pl
from jax.experimental.pallas import tpu as pltpu


# Conservative scoped-VMEM budget: 32 MiB fits every generation (v7x physical
# VMEM is 64 MiB; v5e/v6e have 128 MiB).
_VMEM_BUDGET_BYTES = 32 * 1024 * 1024


def _linear_kernel(x_ref, w_ref, b_ref, o_ref):
    # x_ref: (TB, D_in), w_ref: (D_in, D_out), b_ref: (1, D_out), o_ref: (TB, D_out)
    # Canonical (B,K)x(K,N) matmul on the MXU with f32 accumulation, then a
    # broadcast bias-add on the VPU (kept f32 -- correct for v5e too).
    acc = jnp.dot(x_ref[...], w_ref[...], preferred_element_type=jnp.float32)
    o_ref[...] = (acc + b_ref[...]).astype(o_ref.dtype)


def prepare_linear_params(weight, bias):
    """One-time parameter layout prep (call at model-load time, NOT per forward).

    Pre-transposes the PyTorch-layout weight (D_out, D_in) -> (D_in, D_out) so
    the kernel runs the canonical (B,K)x(K,N) MXU matmul with no in-kernel
    transpose, and reshapes bias to a broadcastable (1, D_out) row.
    """
    w_t = jnp.asarray(weight).T            # (D_in, D_out)
    b2d = jnp.asarray(bias).reshape(1, -1)  # (1, D_out)
    return w_t, b2d


def _pick_batch_tile(B, D_in, D_out, itemsize, batch_tile):
    """Static (trace-time) batch-tile choice.

    Small batches: a single full-batch tile (block_shape == full array dims is
    legal, so no padding is ever needed).  Large batches: stream `batch_tile`
    rows per grid step (=> nb >= 2, so both v7x TensorCores get work), shrunk
    if the double-buffered x/out tiles plus the resident weight/bias would not
    fit the conservative VMEM budget.
    """
    if B <= batch_tile:
        return B
    tb = batch_tile
    fixed = 2 * (D_in * D_out + D_out) * itemsize          # resident weight + bias
    while tb > 8 and fixed + 2 * tb * (D_in + D_out) * itemsize > _VMEM_BUDGET_BYTES:
        tb //= 2
    # Note: for very large D_in/D_out a K/N grid axis with an f32 accumulator
    # scratch would be needed; out of scope for this module's sizes.
    return max(tb, 8)


@functools.partial(jax.jit, static_argnames=("batch_tile",))
def linear_forward(x, w_t, b2d, *, batch_tile=1024):
    """y = x @ W.T + b via a single Pallas TPU kernel.

    `x`   : (B, D_in)   activations (unpadded)
    `w_t` : (D_in, D_out) pre-transposed weight from prepare_linear_params
    `b2d` : (1, D_out)   bias row from prepare_linear_params
    Returns (B, D_out), exactly the nn.Linear forward.
    """
    B, D_in = x.shape
    D_out = w_t.shape[1]

    TB = _pick_batch_tile(B, D_in, D_out, x.dtype.itemsize, batch_tile)
    nb = pl.cdiv(B, TB)

    return pl.pallas_call(
        _linear_kernel,
        out_shape=jax.ShapeDtypeStruct((B, D_out), x.dtype),
        grid=(nb,),
        in_specs=[
            pl.BlockSpec((TB, D_in), lambda i: (i, 0)),      # stream activations
            pl.BlockSpec((D_in, D_out), lambda i: (0, 0)),   # weight: VMEM-resident
            pl.BlockSpec((1, D_out), lambda i: (0, 0)),      # bias:   VMEM-resident
        ],
        out_specs=pl.BlockSpec((TB, D_out), lambda i: (i, 0)),
        compiler_params=pltpu.CompilerParams(
            dimension_semantics=("parallel",),   # batch tiles independent (v7x 2 TCs)
            vmem_limit_bytes=_VMEM_BUDGET_BYTES,
        ),
    )(x, w_t, b2d)


if __name__ == "__main__":
    # Module config: input_dim=32, output_dim=16; batch=8.
    input_dim, output_dim, batch = 32, 16, 8

    key = jax.random.PRNGKey(0)
    k_x, k_w, k_b, k_x2 = jax.random.split(key, 4)

    # Deterministic "parameters" (mimic nn.Linear init scale 1/sqrt(fan_in)).
    bound = 1.0 / jnp.sqrt(jnp.float32(input_dim))
    weight = jax.random.uniform(k_w, (output_dim, input_dim), jnp.float32,
                                minval=-bound, maxval=bound)
    bias = jax.random.uniform(k_b, (output_dim,), jnp.float32,
                              minval=-bound, maxval=bound)

    # One-time parameter prep (load time), out of the per-call path.
    w_t, b2d = prepare_linear_params(weight, bias)

    # --- Shipped config: batch=8, single full-batch tile, no padding/slice. ---
    x = jax.random.normal(k_x, (batch, input_dim), jnp.float32)
    out = jax.block_until_ready(linear_forward(x, w_t, b2d))
    ref = x @ weight.T + bias
    assert out.shape == (batch, output_dim)
    assert jnp.allclose(out, ref, atol=1e-5, rtol=1e-5), "mismatch vs reference (small batch)"

    # --- Large-batch path: exercises the batch grid (nb=2, "parallel"). ---
    big_batch = 2048
    x_big = jax.random.normal(k_x2, (big_batch, input_dim), jnp.float32)
    out_big = jax.block_until_ready(linear_forward(x_big, w_t, b2d))
    ref_big = x_big @ weight.T + bias
    assert out_big.shape == (big_batch, output_dim)
    assert jnp.allclose(out_big, ref_big, atol=1e-5, rtol=1e-5), "mismatch vs reference (big batch)"

    print("KERNEL_OK")
</pallas_src>

<mosaic_0001>
module attributes {stable_mosaic.version = 11 : i64} {
  func.func @_linear_kernel(%arg0: i32, %arg1: memref<8x32xf32, #tpu.memory_space<vmem>>, %arg2: memref<32x16xf32, #tpu.memory_space<vmem>>, %arg3: memref<1x16xf32, #tpu.memory_space<vmem>>, %arg4: memref<8x16xf32, #tpu.memory_space<vmem>>) attributes {dimension_semantics = [#tpu.dimension_semantics<parallel>], iteration_bounds = array<i64: 1>, scalar_prefetch = 0 : i64, scratch_operands = 0 : i64, tpu.core_type = #tpu.core_type<tc>, window_params = [{transform_indices = @transform_0, window_bounds = array<i64: 8, 32>}, {pipeline_mode = #tpu.pipeline_mode<synchronous>, transform_indices = @transform_1, window_bounds = array<i64: 32, 16>}, {pipeline_mode = #tpu.pipeline_mode<synchronous>, transform_indices = @transform_2, window_bounds = array<i64: 1, 16>}, {transform_indices = @transform_3, window_bounds = array<i64: 8, 16>}]} {
    %c0 = arith.constant 0 : index
    %c0_0 = arith.constant 0 : index
    %0 = vector.load %arg1[%c0, %c0_0] : memref<8x32xf32, #tpu.memory_space<vmem>>, vector<8x32xf32>
    %c0_1 = arith.constant 0 : index
    %c0_2 = arith.constant 0 : index
    %1 = vector.load %arg2[%c0_1, %c0_2] : memref<32x16xf32, #tpu.memory_space<vmem>>, vector<32x16xf32>
    %cst = arith.constant dense<0.000000e+00> : vector<8x16xf32>
    %2 = tpu.matmul %0, %1, %cst {dimension_numbers = #tpu.dot_dimension_numbers<[1], [0], [0], [1], [0, 0, 1, 1], [], []>} : vector<8x32xf32>, vector<32x16xf32>, vector<8x16xf32> -> vector<8x16xf32>
    %c0_3 = arith.constant 0 : index
    %c0_4 = arith.constant 0 : index
    %3 = vector.load %arg3[%c0_3, %c0_4] : memref<1x16xf32, #tpu.memory_space<vmem>>, vector<1x16xf32>
    %4 = vector.broadcast %3 : vector<1x16xf32> to vector<8x16xf32>
    %5 = arith.addf %2, %4 : vector<8x16xf32>
    %c0_5 = arith.constant 0 : index
    %c0_6 = arith.constant 0 : index
    %6 = vector.load %arg4[%c0_5, %c0_6] : memref<8x16xf32, #tpu.memory_space<vmem>>, vector<8x16xf32>
    tpu.vector_store %arg4[%c0_5, %c0_6], %5 {strides = array<i32>} : memref<8x16xf32, #tpu.memory_space<vmem>>, vector<8x16xf32>,
    return
  }
  func.func @transform_0(%arg0: i32) -> (i32, i32) {
    %c0_i32 = arith.constant 0 : i32
    %c0_i32_0 = arith.constant 0 : i32
    return %arg0, %c0_i32 : i32, i32
  }
  func.func @transform_1(%arg0: i32) -> (i32, i32) {
    %c0_i32 = arith.constant 0 : i32
    %c0_i32_0 = arith.constant 0 : i32
    %c0_i32_1 = arith.constant 0 : i32
    return %c0_i32, %c0_i32_0 : i32, i32
  }
  func.func @transform_2(%arg0: i32) -> (i32, i32) {
    %c0_i32 = arith.constant 0 : i32
    %c0_i32_0 = arith.constant 0 : i32
    %c0_i32_1 = arith.constant 0 : i32
    return %c0_i32, %c0_i32_0 : i32, i32
  }
  func.func @transform_3(%arg0: i32) -> (i32, i32) {
    %c0_i32 = arith.constant 0 : i32
    %c0_i32_0 = arith.constant 0 : i32
    return %arg0, %c0_i32 : i32, i32
  }
}

</mosaic_0001>

<llo_original>
// kernel: linear_forward.1
$region0: #{linear_forward.1}
  #allocation0 [shape = 'u32[]', space=smem, size = 0x4, offset = 0x4, fixed_abs, tag = 'smem constant byte address 0x4 - core index']
  #allocation1 [shape = 'u32[144,128]{1,0:T(1,128)}', space=vmem, size = 0x12000, scoped, tag = 'internal scratch']
  %s0 = inlined_call_operand.vmem [shape: f32[8,32], index: 0, kind: input, shape index: {}]
  %s1 = inlined_call_operand.vmem [shape: f32[32,16], index: 1, kind: input, shape index: {}]
  %s2 = inlined_call_operand.vmem [shape: f32[1,16], index: 2, kind: input, shape index: {}]
  %s3 = inlined_call_operand.hbm [shape: f32[8,16], index: 3, kind: output, shape index: {}]
  %s4 = sld [smem:[#allocation0]]
  $region22: #{linear_forward.1} parent=0
    _
  %s6 = ssub.s32 1, %s4
  %s7 = scalar_select 0, %s6, %s4
  $region1: #{linear_forward.1} parent=0
    #allocation2 [shape = 'u8[4096]{0}', space=vmem, size = 0x1000, scoped, tag = 'output window, operand 0, single buffered']
    #allocation3 [shape = 's32[1]{0}', space=sflag, size = 0x4, scoped, tag = 'scoped memory for linear_forward.1']
    %8 = vsyncpa [#allocation3], 0
    // Predicated region
    $region2: #{linear_forward.1} parent=1 // pred_check
      _
    $region3: #{linear_forward.1} parent=1 // pred_check_branch
      %10 = sbr.rel (0) target = $region5
    $region4: #{linear_forward.1} parent=1 // pred_region
      _
    $region5: #{linear_forward.1} parent=1 // pred_fallthru
      _
    // Predicated region
    $region6: #{linear_forward.1} parent=1 // pred_check
      _
    $region7: #{linear_forward.1} parent=1 // pred_check_branch
      %12 = sbr.rel (0) target = $region9
    $region8: #{linear_forward.1} parent=1 // pred_region
      _
    $region9: #{linear_forward.1} parent=1 // pred_fallthru
      _
    // Predicated region
    $region10: #{linear_forward.1} parent=1 // pred_check
      _
    $region11: #{linear_forward.1} parent=1 // pred_check_branch
      %14 = sbr.rel (0) target = $region13
    $region12: #{linear_forward.1} parent=1 // pred_region
      _
    $region13: #{linear_forward.1} parent=1 // pred_fallthru
      _
    %v15 = vld [vmem:[%s0] sm:$0xff]
    %v16 = vld [vmem:[%s1] sm:$0xff]
    %v17 = vld [vmem:[%s1 + $0x8] sm:$0xff]
    %v18 = vld [vmem:[%s1 + $0x10] sm:$0xff]
    %v19 = vld [vmem:[%s1 + $0x18] sm:$0xff]
    %v20 = vld [vmem:[%s2] sm:$0x1]
    %v22 = vlaneseq
    %v23 = vshrl.u32 %v22, 7
    %v24 = vsub.s32 0, %v23
    %v25 = vrot.slane %v20, %v24
    %vm27 = vcmask 261120
    %v29 = vsel %vm27, %v15, 0
    %31 = vmatprep.subr.mxu0 0.0
    %32 = vmatpush1.msra.mxu0 %v16
    %33 = vmatprep.subr.mxu0 0.0
    %34 = vmatpush1.msra.mxu0 %v17
    %35 = vmatprep.subr.mxu0 0.0
    %36 = vmatpush1.msra.mxu0 %v18
    %37 = vmatprep.subr.mxu0 0.0
    %38 = vmatpush1.msra.mxu0 %v19
    %39 = vmatprep.subr.mxu0 0.0
    %40 = vmatpush1.msra.mxu0 0.0
    %41 = vmatprep.subr.mxu0 0.0
    %42 = vmatpush1.msra.mxu0 0.0
    %43 = vmatprep.subr.mxu0 0.0
    %44 = vmatpush1.msra.mxu0 0.0
    %45 = vmatprep.subr.mxu0 0.0
    %46 = vmatpush1.msra.mxu0 0.0
    %47 = vmatprep.subr.mxu0 0.0
    %48 = vmatpush1.msra.mxu0 0.0
    %49 = vmatprep.subr.mxu0 0.0
    %50 = vmatpush1.msra.mxu0 0.0
    %51 = vmatprep.subr.mxu0 0.0
    %52 = vmatpush1.msra.mxu0 0.0
    %53 = vmatprep.subr.mxu0 0.0
    %54 = vmatpush1.msra.mxu0 0.0
    %55 = vmatprep.subr.mxu0 0.0
    %56 = vmatpush1.msra.mxu0 0.0
    %57 = vmatprep.subr.mxu0 0.0
    %58 = vmatpush1.msra.mxu0 0.0
    %59 = vmatprep.subr.mxu0 0.0
    %60 = vmatpush1.msra.mxu0 0.0
    %61 = vmatprep.subr.mxu0 0.0
    %62 = vmatpush1.msra.mxu0 0.0
    %63 = vmatprep.subr.mxu0 0.0
    %64 = vmatpush1.msra.mxu0 0.0
    %65 = vmatprep.subr.mxu0 0.0
    %66 = vmatpush1.msra.mxu0 0.0
    %67 = vmatprep.subr.mxu0 0.0
    %68 = vmatpush1.msra.mxu0 0.0
    %69 = vmatprep.subr.mxu0 0.0
    %70 = vmatpush1.msra.mxu0 0.0
    %71 = vmatprep.subr.mxu0 0.0
    %72 = vmatpush1.msra.mxu0 0.0
    %73 = vmatprep.subr.mxu0 0.0
    %74 = vmatpush1.msra.mxu0 0.0
    %75 = vmatprep.subr.mxu0 0.0
    %76 = vmatpush1.msra.mxu0 0.0
    %77 = vmatprep.subr.mxu0 0.0
    %78 = vmatpush1.msra.mxu0 0.0
    %79 = vmatprep.subr.mxu0 0.0
    %80 = vmatpush1.msra.mxu0 0.0
    %81 = vmatprep.subr.mxu0 0.0
    %82 = vmatpush1.msra.mxu0 0.0
    %83 = vmatprep.subr.mxu0 0.0
    %84 = vmatpush1.msra.mxu0 0.0
    %85 = vmatprep.subr.mxu0 0.0
    %86 = vmatpush1.msra.mxu0 0.0
    %87 = vmatprep.subr.mxu0 0.0
    %88 = vmatpush1.msra.mxu0 0.0
    %89 = vmatprep.subr.mxu0 0.0
    %90 = vmatpush1.msra.mxu0 0.0
    %91 = vmatprep.subr.mxu0 0.0
    %92 = vmatpush1.msra.mxu0 0.0
    %93 = vmatprep.subr.mxu0 0.0
    %94 = vmatpush1.msra.mxu0 0.0
    %95 = vmatprep.mubr.f32.mxu0 0.0
    %96 = vmatmul.mubr.f32.gmra.mrb[0].mxu0 %v29
    %v97 = vpop.f32.mrb[0].mxu0
    %v98 = vadd.f32 %v25, %v97
    %v99 = vpop.f32.mrb[0].mxu0
    %100 = vdwg.mxu0
    %vm101 = vcmask 130048
    %102 = vst.msk [vmem:[#allocation2] sm:$0xff] %vm101, %v98
    // Predicated region
    $region14: #{linear_forward.1} parent=1 // pred_check
      _
    $region15: #{linear_forward.1} parent=1 // pred_check_branch
      %104 = sbr.rel (0) target = $region17
    $region16: #{linear_forward.1} parent=1 // pred_region
      %s106 = ssub.s32 128, 128
      %107 = vsyncadd [#allocation3], %s106
      %s109 = sshll.u32 [#allocation2], 4
      %s110 = int_to_ptr.vmem [resolvable:$true] %s109
      %112 = dma.vmem_to_hbm [thread:$0]  %s110, 128, %s3, [#allocation3]
    $region17: #{linear_forward.1} parent=1 // pred_fallthru
      _
    // Predicated region
    $region18: #{linear_forward.1} parent=1 // pred_check
      _
    $region19: #{linear_forward.1} parent=1 // pred_check_branch
      %114 = sbr.rel (0) target = $region21
    $region20: #{linear_forward.1} parent=1 // pred_region
      %115 = dma.done [#allocation3], 128
    $region21: #{linear_forward.1} parent=1 // pred_fallthru
      _
    %116 = vsyncpa [#allocation3], 1

</llo_original>
